<compile_context>
chip_gen: v5e
topology: v5e:2x2
jax: 0.10.0
libtpu: 0.0.40
codegen_flags: <defaults>
</compile_context>

<pallas_src>
import jax
import jax.numpy as jnp
from jax import lax
from jax.experimental import pallas as pl
from jax.experimental.pallas import tpu as pltpu


# ---------------------------------------------------------------------------- helpers
def _round_up(v, m):
    return -(-v // m) * m


def _full_spec(shape):
    nd = len(shape)
    return pl.BlockSpec(shape, lambda i, _nd=nd: (0,) * _nd)


# ---------------------------------------------------------------------------- MLP kernel
def _make_mlp_kernel(num_inputs, num_layers, last_activation):
    """Fused stack of 1x1-conv (per-row linear) layers + ReLU on a row tile.

    Layer 0 may take `num_inputs` inputs with split weights (avoids host-side concat).
    Activations are cast to the weight dtype (f32 or bf16) before each dot; MXU accumulates f32.
    """

    def kernel(*refs):
        out_ref = refs[-1]
        x_refs = refs[:num_inputs]
        prefs = refs[num_inputs:-1]
        pi = 0
        acc = None
        for xi in range(num_inputs):
            w = prefs[pi][...]
            pi += 1
            t = jnp.dot(x_refs[xi][...].astype(w.dtype), w,
                        preferred_element_type=jnp.float32)
            acc = t if acc is None else acc + t
        h = acc + prefs[pi][...]
        pi += 1
        if num_layers > 1 or last_activation:
            h = jnp.maximum(h, 0.0)
        for l in range(1, num_layers):
            w = prefs[pi][...]
            pi += 1
            b = prefs[pi][...]
            pi += 1
            h = jnp.dot(h.astype(w.dtype), w, preferred_element_type=jnp.float32) + b
            if (l + 1 < num_layers) or last_activation:
                h = jnp.maximum(h, 0.0)
        out_ref[...] = h

    return kernel


def mlp_stack_pallas(inputs, layers, *, last_activation=True, tm=2048, vmem_limit_bytes=None):
    """inputs: tuple of (R, Ci) f32 arrays; layers: [([w, ...], b), ...] -> (R, C_out) f32.

    The last layer is zero-padded to >=128 output lanes so the output DMA is lane-dense
    (unmasked vst); the padded columns are sliced off after the call.
    """
    inputs = tuple(inputs)
    assert len(layers[0][0]) == len(inputs)
    R = inputs[0].shape[0]
    c_out = layers[-1][1].shape[-1]
    c_store = max(_round_up(c_out, 128), 128)
    if c_store != c_out:
        ws_last, b_last = layers[-1]
        ws_last = [jnp.pad(w, ((0, 0), (0, c_store - c_out))) for w in ws_last]
        b_last = jnp.pad(b_last, ((0, 0), (0, c_store - c_out)))
        layers = list(layers[:-1]) + [(ws_last, b_last)]

    tm_eff = max(8, min(_round_up(tm, 8), _round_up(R, 8)))
    rp = _round_up(R, tm_eff)
    inputs_p = tuple(jnp.pad(a, ((0, rp - R), (0, 0))) for a in inputs)

    flat = []
    for ws, b in layers:
        flat.extend(list(ws))
        flat.append(b)

    out = pl.pallas_call(
        _make_mlp_kernel(len(inputs), len(layers), last_activation),
        out_shape=jax.ShapeDtypeStruct((rp, c_store), jnp.float32),
        grid=(rp // tm_eff,),
        in_specs=[pl.BlockSpec((tm_eff, a.shape[1]), lambda i: (i, 0)) for a in inputs_p]
        + [_full_spec(a.shape) for a in flat],
        out_specs=pl.BlockSpec((tm_eff, c_store), lambda i: (i, 0)),
        compiler_params=pltpu.CompilerParams(
            dimension_semantics=("parallel",),
            vmem_limit_bytes=vmem_limit_bytes),
    )(*inputs_p, *flat)
    out = out[:R]
    if c_store != c_out:
        out = out[:, :c_out]
    return out


def _mlp_ref(inputs, layers, last_activation):
    ws0, b0 = layers[0]
    acc = None
    for xa, w in zip(inputs, ws0):
        t = jnp.dot(xa.astype(w.dtype), w, preferred_element_type=jnp.float32)
        acc = t if acc is None else acc + t
    h = acc + b0
    if len(layers) > 1 or last_activation:
        h = jnp.maximum(h, 0.0)
    for l, (ws, b) in enumerate(layers[1:], start=1):
        w = ws[0]
        h = jnp.dot(h.astype(w.dtype), w, preferred_element_type=jnp.float32) + b
        if (l + 1 < len(layers)) or last_activation:
            h = jnp.maximum(h, 0.0)
    return h


def _apply_mlp(inputs, layers, last_activation, use_pallas, tm, vmem_limit_bytes=None):
    if use_pallas:
        return mlp_stack_pallas(inputs, layers, last_activation=last_activation, tm=tm,
                                vmem_limit_bytes=vmem_limit_bytes)
    return _mlp_ref(inputs, layers, last_activation)


# ---------------------------------------------------------------------------- KNN fusion kernel
def _knn_fusion_kernel(feats_ref, wa1, ba1, wa2, ba2, wa3, ba3,
                       wb1p, wb1m, bb1, wb2, bb2, out_ref):
    """GeneralKNNFusionModule body for one tile of TM query nodes.

    feats_ref : (TM, K, 128)  zero-padded [de-centered neighbour coords ++ neighbour features]
    out_ref   : (TM, 256)
    bf16 operands / f32 MXU accumulation; the concat-with-max is folded into split weights.
    """
    tm, K, c_in = feats_ref.shape
    w1 = wa1[...]
    cd = w1.dtype
    x = feats_ref[...].reshape(tm * K, c_in).astype(cd)
    h = jnp.maximum(jnp.dot(x, w1, preferred_element_type=jnp.float32) + ba1[...], 0.0)
    h = jnp.maximum(jnp.dot(h.astype(cd), wa2[...], preferred_element_type=jnp.float32)
                    + ba2[...], 0.0)
    h = jnp.maximum(jnp.dot(h.astype(cd), wa3[...], preferred_element_type=jnp.float32)
                    + ba3[...], 0.0)
    ca = h.shape[1]
    hmax = jnp.max(h.reshape(tm, K, ca), axis=1)                           # (TM, CA) max over K
    t_per = jnp.dot(h.astype(cd), wb1p[...], preferred_element_type=jnp.float32)   # (TM*K, CB)
    t_max = jnp.dot(hmax.astype(cd), wb1m[...], preferred_element_type=jnp.float32) + bb1[...]
    cb = t_per.shape[1]
    y = jnp.maximum(t_per.reshape(tm, K, cb) + t_max[:, None, :], 0.0)     # (TM, K, CB)
    y2 = jnp.maximum(
        jnp.dot(y.reshape(tm * K, cb).astype(cd), wb2[...],
                preferred_element_type=jnp.float32) + bb2[...], 0.0)
    out_ref[...] = jnp.max(y2.reshape(tm, K, -1), axis=1)                  # max over K


def knn_fusion_pallas(feats, kp, *, tm=256, vmem_limit_bytes=32 * 1024 * 1024):
    """feats: (R, K, 128) f32 -> (R, 256) f32."""
    R, K, c_in = feats.shape
    c_out = kp["after2"][1].shape[-1]
    tm_eff = max(8, min(_round_up(tm, 8), _round_up(R, 8)))
    rp = _round_up(R, tm_eff)
    feats_p = jnp.pad(feats, ((0, rp - R), (0, 0), (0, 0)))
    flat = [a for wb in kp["before"] for a in wb] + [
        kp["after1_p"], kp["after1_m"], kp["after1_b"], kp["after2"][0], kp["after2"][1]]
    out = pl.pallas_call(
        _knn_fusion_kernel,
        out_shape=jax.ShapeDtypeStruct((rp, c_out), jnp.float32),
        grid=(rp // tm_eff,),
        in_specs=[pl.BlockSpec((tm_eff, K, c_in), lambda i: (i, 0, 0))]
        + [_full_spec(a.shape) for a in flat],
        out_specs=pl.BlockSpec((tm_eff, c_out), lambda i: (i, 0)),
        compiler_params=pltpu.CompilerParams(
            dimension_semantics=("parallel",),
            vmem_limit_bytes=vmem_limit_bytes),
    )(feats_p, *flat)
    return out[:R]


def _knn_fusion_ref(feats, kp):
    R, K, C = feats.shape
    cd = kp["before"][0][0].dtype
    h = feats.reshape(R * K, C)
    for (w, b) in kp["before"]:
        h = jnp.maximum(jnp.dot(h.astype(w.dtype), w, preferred_element_type=jnp.float32) + b,
                        0.0)
    ca = h.shape[1]
    hmax = jnp.max(h.reshape(R, K, ca), axis=1)
    t_per = jnp.dot(h.astype(cd), kp["after1_p"], preferred_element_type=jnp.float32)
    t_max = jnp.dot(hmax.astype(cd), kp["after1_m"], preferred_element_type=jnp.float32) \
        + kp["after1_b"]
    cb = t_per.shape[1]
    y = jnp.maximum(t_per.reshape(R, K, cb) + t_max[:, None, :], 0.0)
    w2, b2 = kp["after2"]
    y2 = jnp.maximum(
        jnp.dot(y.reshape(R * K, cb).astype(w2.dtype), w2,
                preferred_element_type=jnp.float32) + b2, 0.0)
    return jnp.max(y2.reshape(R, K, -1), axis=1)


def _apply_knn_fusion(feats, kp, use_pallas, tm):
    if use_pallas:
        return knn_fusion_pallas(feats, kp, tm=tm)
    return _knn_fusion_ref(feats, kp)


# ---------------------------------------------------------------------------- full forward
def rpn_detector_lite_forward(x, sn, node, params, *, k, node_knn_k, sigma_lower_bound,
                              use_pallas=True, tm_points=2048, tm_head=512, tm_nodes=256):
    """x: (B,3,N), sn: (B,sn_len,N), node: (B,3,M).
    Returns (som_node_cluster_mean (B,3,M), keypoints (B,3,M), sigmas (B,M), None)."""
    B, _, N = x.shape
    M = node.shape[2]
    kN = k * N
    sn_len = sn.shape[1]

    # ---- som.query_topk: k nearest nodes per point (||a||^2 + ||b||^2 - 2ab matmul identity)
    x_rows = jnp.transpose(x, (0, 2, 1))                                  # (B, N, 3)
    node_rows = jnp.transpose(node, (0, 2, 1))                            # (B, M, 3)
    d2 = (jnp.sum(x_rows * x_rows, -1)[:, :, None]
          + jnp.sum(node_rows * node_rows, -1)[:, None, :]
          - 2.0 * jnp.einsum('bnc,bmc->bnm', x_rows, node_rows))          # (B, N, M)
    _, nn_idx = lax.top_k(-d2, k)                                         # (B, N, k)
    min_idx = jnp.transpose(nn_idx, (0, 2, 1)).reshape(B, kN)             # repeat order
    seg = (min_idx + (jnp.arange(B, dtype=min_idx.dtype) * M)[:, None]).reshape(B * kN)

    sn_rows = jnp.transpose(sn, (0, 2, 1))                                # (B, N, sn_len)
    x_stack = jnp.tile(x_rows, (1, k, 1)).reshape(B * kN, 3)
    sn_stack = jnp.tile(sn_rows, (1, k, 1)).reshape(B * kN, sn_len)

    # ---- segment reductions replace the one-hot masked mean / masked max glue ----
    counts = jax.ops.segment_sum(jnp.ones((B * kN,), jnp.float32), seg,
                                 num_segments=B * M)                      # == mask_row_sum
    sums = jax.ops.segment_sum(x_stack, seg, num_segments=B * M)          # (B*M, 3)
    cluster_mean = sums / (counts[:, None] + 1e-5)                        # (B*M, 3)
    nonempty = counts > 0.5                                               # == mask_row_max
    som_node_cluster_mean = jnp.transpose(cluster_mean.reshape(B, M, 3), (0, 2, 1))

    centers = jnp.take(cluster_mean, seg, axis=0)                         # (B*kN, 3)
    rows1 = jnp.concatenate([x_stack - centers, sn_stack], axis=-1)       # (B*kN, 3+sn_len)

    # ---- first_pointnet ----
    fp = _apply_mlp((rows1,), params["first"], True, use_pallas, tm_points)        # (B*kN, 32)
    fmax = jnp.where(nonempty[:, None],
                     jax.ops.segment_max(fp, seg, num_segments=B * M), 0.0)        # (B*M, 32)
    scattered = jnp.take(fmax, seg, axis=0)                                         # (B*kN, 32)

    # ---- second_pointnet (concat folded into split first-layer weights) ----
    sp = _apply_mlp((fp, scattered), params["second"], True, use_pallas, tm_points)  # (B*kN,64)
    smax = jnp.where(nonempty[:, None],
                     jax.ops.segment_max(sp, seg, num_segments=B * M), 0.0)        # (B*M, 64)

    # ---- GeneralKNNFusionModule over the node graph (query = database = cluster means) ----
    cm_b = cluster_mean.reshape(B, M, 3)
    cm_sq = jnp.sum(cm_b * cm_b, -1)                                      # (B, M)
    d2n = cm_sq[:, :, None] + cm_sq[:, None, :] \
        - 2.0 * jnp.einsum('bmc,bnc->bmn', cm_b, cm_b)                    # (B, M, M)
    _, knn_I = lax.top_k(-d2n, node_knn_k)                                # (B, M, K)
    knn_seg = (knn_I + (jnp.arange(B, dtype=knn_I.dtype) * M)[:, None, None]).reshape(-1)
    nb_coord = jnp.take(cluster_mean, knn_seg, axis=0).reshape(B * M, node_knn_k, 3)
    nb_feat = jnp.take(smax, knn_seg, axis=0).reshape(B * M, node_knn_k, smax.shape[-1])
    knn_in = jnp.concatenate([nb_coord - cluster_mean[:, None, :], nb_feat], axis=-1)
    c_in_pad = params["knn"]["c_in_pad"]
    knn_in = jnp.pad(knn_in, ((0, 0), (0, 0), (0, c_in_pad - knn_in.shape[-1])))   # -> 128 lanes
    knn_feat = _apply_knn_fusion(knn_in, params["knn"], use_pallas, tm_nodes)      # (B*M, 256)

    # ---- head: mlp1/mlp2 fused in Pallas (split weights, 256-lane-dense), mlp3 in XLA ----
    hid = _apply_mlp((smax, knn_feat), params["head_hidden"], True, use_pallas, tm_head)
    w3, b3 = params["head_out"]
    ks = jnp.dot(hid, w3) + b3                                            # (B*M, 4)
    keypoint_sigma = jnp.transpose(ks.reshape(B, M, 4), (0, 2, 1))        # (B, 4, M)

    keypoints = keypoint_sigma[:, 0:3, :] + som_node_cluster_mean
    sigmas = jax.nn.softplus(keypoint_sigma[:, 3, :]) + sigma_lower_bound
    return som_node_cluster_mean, keypoints, sigmas, None


# ---------------------------------------------------------------------------- params
def init_params(key, sn_len, C1, C2, head_out=4, scale=0.1):
    h1 = C1 // 2
    ka = C2 // 2
    dims = [
        ("first1", 3 + sn_len, h1), ("first2", h1, h1), ("first3", h1, h1),
        ("second1", C1, C1), ("second2", C1, C1),
        ("knnb1", 3 + C1, ka), ("knnb2", ka, ka), ("knnb3", ka, ka),
        ("knna1", 2 * ka, C2), ("knna2", C2, C2),
        ("head1", C1 + C2, 512), ("head2", 512, 256), ("head3", 256, head_out),
    ]
    keys = jax.random.split(key, 2 * len(dims))
    raw = {}
    for i, (name, cin, cout) in enumerate(dims):
        w = jax.random.normal(keys[2 * i], (cin, cout), jnp.float32) * scale
        b = jax.random.normal(keys[2 * i + 1], (1, cout), jnp.float32) * scale
        raw[name] = (w, b)
    return raw


def prepare_params(raw, sn_len, C1, C2, mxu_dtype=jnp.bfloat16):
    """Split concat-feeding weights, zero-pad for lane-dense DMA, pre-cast MXU-bound weights."""
    h1 = C1 // 2
    ka = C2 // 2
    bf = lambda w: w.astype(mxu_dtype)

    first = [([raw["first1"][0]], raw["first1"][1]),
             ([raw["first2"][0]], raw["first2"][1]),
             ([raw["first3"][0]], raw["first3"][1])]

    w_s1, b_s1 = raw["second1"]                       # 64 -> 64, input = cat(fp, scattered)
    second = [([w_s1[:h1], w_s1[h1:]], b_s1),
              ([raw["second2"][0]], raw["second2"][1])]

    w_k1, b_k1 = raw["knnb1"]                         # (3+C1) -> 128
    c_in_knn = w_k1.shape[0]
    c_in_pad = max(_round_up(c_in_knn, 128), 128)
    w_k1p = jnp.pad(w_k1, ((0, c_in_pad - c_in_knn), (0, 0)))
    w_a1, b_a1 = raw["knna1"]                         # cat(h, hmax): 2*128 -> 256, split
    knn = {
        "before": [(bf(w_k1p), b_k1),
                   (bf(raw["knnb2"][0]), raw["knnb2"][1]),
                   (bf(raw["knnb3"][0]), raw["knnb3"][1])],
        "after1_p": bf(w_a1[:ka]), "after1_m": bf(w_a1[ka:]), "after1_b": b_a1,
        "after2": (bf(raw["knna2"][0]), raw["knna2"][1]),
        "c_in_pad": c_in_pad,
    }

    w_h1, b_h1 = raw["head1"]                         # 320 -> 512, input = cat(smax, knn_feat)
    head_hidden = [([bf(w_h1[:C1]), bf(w_h1[C1:])], b_h1),
                   ([bf(raw["head2"][0])], raw["head2"][1])]
    head_out = raw["head3"]                           # 256 -> 4, applied in plain XLA

    return {"first": first, "second": second, "knn": knn,
            "head_hidden": head_hidden, "head_out": head_out}


# ---------------------------------------------------------------------------- main
if __name__ == "__main__":
    B, N, M = 2, 16, 8
    K_SOM = 3                 # opt.k
    NODE_KNN_K_1 = 8          # opt.node_knn_k_1 (>= 2); 8 keeps the (K, lanes) tile sublane-clean
    SN_LEN = 3                # opt.surface_normal_len
    SIGMA_LB = 1e-3           # opt.loss_sigma_lower_bound
    C1, C2 = 64, 256

    key = jax.random.PRNGKey(0)
    kx, ksn, knode, kparam = jax.random.split(key, 4)
    x = jax.random.uniform(kx, (B, 3, N), jnp.float32, minval=-1.0, maxval=1.0)
    sn_raw = jax.random.normal(ksn, (B, SN_LEN, N), jnp.float32)
    sn = sn_raw / (jnp.linalg.norm(sn_raw, axis=1, keepdims=True) + 1e-8)
    node = jax.random.uniform(knode, (B, 3, M), jnp.float32, minval=-1.0, maxval=1.0)

    raw = init_params(kparam, SN_LEN, C1, C2)
    params = prepare_params(raw, SN_LEN, C1, C2)

    som_mean, keypoints, sigmas, descriptors = rpn_detector_lite_forward(
        x, sn, node, params, k=K_SOM, node_knn_k=NODE_KNN_K_1,
        sigma_lower_bound=SIGMA_LB, use_pallas=True)
    som_mean = jax.block_until_ready(som_mean)
    keypoints = jax.block_until_ready(keypoints)
    sigmas = jax.block_until_ready(sigmas)

    assert som_mean.shape == (B, 3, M)
    assert keypoints.shape == (B, 3, M)
    assert sigmas.shape == (B, M)
    assert descriptors is None

    # pure-jnp reference (same glue + same bf16 operand policy, plain dots instead of Pallas)
    som_ref, kp_ref, sg_ref, _ = rpn_detector_lite_forward(
        x, sn, node, params, k=K_SOM, node_knn_k=NODE_KNN_K_1,
        sigma_lower_bound=SIGMA_LB, use_pallas=False)

    assert jnp.allclose(som_mean, som_ref, atol=1e-6, rtol=1e-6)
    assert jnp.allclose(keypoints, kp_ref, atol=1e-2, rtol=1e-2), (
        float(jnp.max(jnp.abs(keypoints - kp_ref))))
    assert jnp.allclose(sigmas, sg_ref, atol=1e-2, rtol=1e-2), (
        float(jnp.max(jnp.abs(sigmas - sg_ref))))

    print("KERNEL_OK")
</pallas_src>

<mosaic_0001>
module attributes {stable_mosaic.version = 11 : i64} {
  func.func @kernel(%arg0: i32, %arg1: memref<96x6xf32, #tpu.memory_space<vmem>>, %arg2: memref<6x32xf32, #tpu.memory_space<vmem>>, %arg3: memref<1x32xf32, #tpu.memory_space<vmem>>, %arg4: memref<32x32xf32, #tpu.memory_space<vmem>>, %arg5: memref<1x32xf32, #tpu.memory_space<vmem>>, %arg6: memref<32x128xf32, #tpu.memory_space<vmem>>, %arg7: memref<1x128xf32, #tpu.memory_space<vmem>>, %arg8: memref<96x128xf32, #tpu.memory_space<vmem>>) attributes {dimension_semantics = [#tpu.dimension_semantics<parallel>], iteration_bounds = array<i64: 1>, scalar_prefetch = 0 : i64, scratch_operands = 0 : i64, tpu.core_type = #tpu.core_type<tc>, window_params = [{transform_indices = @transform_0, window_bounds = array<i64: 96, 6>}, {pipeline_mode = #tpu.pipeline_mode<synchronous>, transform_indices = @transform_1, window_bounds = array<i64: 6, 32>}, {pipeline_mode = #tpu.pipeline_mode<synchronous>, transform_indices = @transform_2, window_bounds = array<i64: 1, 32>}, {pipeline_mode = #tpu.pipeline_mode<synchronous>, transform_indices = @transform_3, window_bounds = array<i64: 32, 32>}, {pipeline_mode = #tpu.pipeline_mode<synchronous>, transform_indices = @transform_4, window_bounds = array<i64: 1, 32>}, {pipeline_mode = #tpu.pipeline_mode<synchronous>, transform_indices = @transform_5, window_bounds = array<i64: 32, 128>}, {pipeline_mode = #tpu.pipeline_mode<synchronous>, transform_indices = @transform_6, window_bounds = array<i64: 1, 128>}, {transform_indices = @transform_7, window_bounds = array<i64: 96, 128>}]} {
    %c0 = arith.constant 0 : index
    %c0_0 = arith.constant 0 : index
    %0 = vector.load %arg2[%c0, %c0_0] : memref<6x32xf32, #tpu.memory_space<vmem>>, vector<6x32xf32>
    %c0_1 = arith.constant 0 : index
    %c0_2 = arith.constant 0 : index
    %1 = vector.load %arg1[%c0_1, %c0_2] : memref<96x6xf32, #tpu.memory_space<vmem>>, vector<96x6xf32>
    %cst = arith.constant dense<0.000000e+00> : vector<96x32xf32>
    %2 = tpu.matmul %1, %0, %cst {dimension_numbers = #tpu.dot_dimension_numbers<[1], [0], [0], [1], [0, 0, 1, 1], [], []>} : vector<96x6xf32>, vector<6x32xf32>, vector<96x32xf32> -> vector<96x32xf32>
    %c0_3 = arith.constant 0 : index
    %c0_4 = arith.constant 0 : index
    %3 = vector.load %arg3[%c0_3, %c0_4] : memref<1x32xf32, #tpu.memory_space<vmem>>, vector<1x32xf32>
    %4 = vector.broadcast %3 : vector<1x32xf32> to vector<96x32xf32>
    %5 = arith.addf %2, %4 : vector<96x32xf32>
    %cst_5 = arith.constant 0.000000e+00 : f32
    %6 = vector.broadcast %cst_5 : f32 to vector<96x32xf32>
    %7 = arith.maximumf %5, %6 : vector<96x32xf32>
    %c0_6 = arith.constant 0 : index
    %c0_7 = arith.constant 0 : index
    %8 = vector.load %arg4[%c0_6, %c0_7] : memref<32x32xf32, #tpu.memory_space<vmem>>, vector<32x32xf32>
    %c0_8 = arith.constant 0 : index
    %c0_9 = arith.constant 0 : index
    %9 = vector.load %arg5[%c0_8, %c0_9] : memref<1x32xf32, #tpu.memory_space<vmem>>, vector<1x32xf32>
    %cst_10 = arith.constant dense<0.000000e+00> : vector<96x32xf32>
    %10 = tpu.matmul %7, %8, %cst_10 {dimension_numbers = #tpu.dot_dimension_numbers<[1], [0], [0], [1], [0, 0, 1, 1], [], []>} : vector<96x32xf32>, vector<32x32xf32>, vector<96x32xf32> -> vector<96x32xf32>
    %11 = vector.broadcast %9 : vector<1x32xf32> to vector<96x32xf32>
    %12 = arith.addf %10, %11 : vector<96x32xf32>
    %cst_11 = arith.constant 0.000000e+00 : f32
    %13 = vector.broadcast %cst_11 : f32 to vector<96x32xf32>
    %14 = arith.maximumf %12, %13 : vector<96x32xf32>
    %c0_12 = arith.constant 0 : index
    %c0_13 = arith.constant 0 : index
    %15 = vector.load %arg6[%c0_12, %c0_13] : memref<32x128xf32, #tpu.memory_space<vmem>>, vector<32x128xf32>
    %c0_14 = arith.constant 0 : index
    %c0_15 = arith.constant 0 : index
    %16 = vector.load %arg7[%c0_14, %c0_15] : memref<1x128xf32, #tpu.memory_space<vmem>>, vector<1x128xf32>
    %cst_16 = arith.constant dense<0.000000e+00> : vector<96x128xf32>
    %17 = tpu.matmul %14, %15, %cst_16 {dimension_numbers = #tpu.dot_dimension_numbers<[1], [0], [0], [1], [0, 0, 1, 1], [], []>} : vector<96x32xf32>, vector<32x128xf32>, vector<96x128xf32> -> vector<96x128xf32>
    %18 = vector.broadcast %16 : vector<1x128xf32> to vector<96x128xf32>
    %19 = arith.addf %17, %18 : vector<96x128xf32>
    %cst_17 = arith.constant 0.000000e+00 : f32
    %20 = vector.broadcast %cst_17 : f32 to vector<96x128xf32>
    %21 = arith.maximumf %19, %20 : vector<96x128xf32>
    %c0_18 = arith.constant 0 : index
    %c0_19 = arith.constant 0 : index
    %22 = vector.load %arg8[%c0_18, %c0_19] : memref<96x128xf32, #tpu.memory_space<vmem>>, vector<96x128xf32>
    tpu.vector_store %arg8[%c0_18, %c0_19], %21 {strides = array<i32>} : memref<96x128xf32, #tpu.memory_space<vmem>>, vector<96x128xf32>,
    return
  }
  func.func @transform_0(%arg0: i32) -> (i32, i32) {
    %c0_i32 = arith.constant 0 : i32
    %c0_i32_0 = arith.constant 0 : i32
    return %arg0, %c0_i32 : i32, i32
  }
  func.func @transform_1(%arg0: i32) -> (i32, i32) {
    %c0_i32 = arith.constant 0 : i32
    %c0_i32_0 = arith.constant 0 : i32
    %c0_i32_1 = arith.constant 0 : i32
    return %c0_i32, %c0_i32_0 : i32, i32
  }
  func.func @transform_2(%arg0: i32) -> (i32, i32) {
    %c0_i32 = arith.constant 0 : i32
    %c0_i32_0 = arith.constant 0 : i32
    %c0_i32_1 = arith.constant 0 : i32
    return %c0_i32, %c0_i32_0 : i32, i32
  }
  func.func @transform_3(%arg0: i32) -> (i32, i32) {
    %c0_i32 = arith.constant 0 : i32
    %c0_i32_0 = arith.constant 0 : i32
    %c0_i32_1 = arith.constant 0 : i32
    return %c0_i32, %c0_i32_0 : i32, i32
  }
  func.func @transform_4(%arg0: i32) -> (i32, i32) {
    %c0_i32 = arith.constant 0 : i32
    %c0_i32_0 = arith.constant 0 : i32
    %c0_i32_1 = arith.constant 0 : i32
    return %c0_i32, %c0_i32_0 : i32, i32
  }
  func.func @transform_5(%arg0: i32) -> (i32, i32) {
    %c0_i32 = arith.constant 0 : i32
    %c0_i32_0 = arith.constant 0 : i32
    %c0_i32_1 = arith.constant 0 : i32
    return %c0_i32, %c0_i32_0 : i32, i32
  }
  func.func @transform_6(%arg0: i32) -> (i32, i32) {
    %c0_i32 = arith.constant 0 : i32
    %c0_i32_0 = arith.constant 0 : i32
    %c0_i32_1 = arith.constant 0 : i32
    return %c0_i32, %c0_i32_0 : i32, i32
  }
  func.func @transform_7(%arg0: i32) -> (i32, i32) {
    %c0_i32 = arith.constant 0 : i32
    %c0_i32_0 = arith.constant 0 : i32
    return %arg0, %c0_i32 : i32, i32
  }
}

</mosaic_0001>

<llo_original>
// kernel: tpu_custom_call.1
$region0: #{tpu_custom_call.1}
  #allocation0 [shape = 'u32[]', space=smem, size = 0x4, offset = 0x4, fixed_abs, tag = 'smem constant byte address 0x4 - core index']
  #allocation1 [shape = 'u32[72,128]{1,0:T(1,128)}', space=vmem, size = 0x9000, scoped, tag = 'internal scratch']
  %s0 = inlined_call_operand.vmem [shape: f32[96,6], index: 0, kind: input, shape index: {}]
  %s1 = inlined_call_operand.vmem [shape: f32[6,32], index: 1, kind: input, shape index: {}]
  %s2 = inlined_call_operand.vmem [shape: f32[1,32], index: 2, kind: input, shape index: {}]
  %s3 = inlined_call_operand.vmem [shape: f32[32,32], index: 3, kind: input, shape index: {}]
  %s4 = inlined_call_operand.vmem [shape: f32[1,32], index: 4, kind: input, shape index: {}]
  %s5 = inlined_call_operand.vmem [shape: f32[32,128], index: 5, kind: input, shape index: {}]
  %s6 = inlined_call_operand.vmem [shape: f32[1,128], index: 6, kind: input, shape index: {}]
  %s7 = inlined_call_operand.hbm [shape: f32[96,128], index: 7, kind: output, shape index: {}]
  %s8 = sld [smem:[#allocation0]]
  $region38: #{tpu_custom_call.1} parent=0
    _
  %s10 = ssub.s32 1, %s8
  %s11 = scalar_select 0, %s10, %s8
  $region1: #{tpu_custom_call.1} parent=0
    #allocation2 [shape = 'u8[49152]{0}', space=vmem, size = 0xc000, scoped, tag = 'output window, operand 0, single buffered']
    #allocation3 [shape = 's32[1]{0}', space=sflag, size = 0x4, scoped, tag = 'scoped memory for tpu_custom_call.1']
    %12 = vsyncpa [#allocation3], 0
    // Predicated region
    $region2: #{tpu_custom_call.1} parent=1 // pred_check
      _
    $region3: #{tpu_custom_call.1} parent=1 // pred_check_branch
      %14 = sbr.rel (0) target = $region5
    $region4: #{tpu_custom_call.1} parent=1 // pred_region
      _
    $region5: #{tpu_custom_call.1} parent=1 // pred_fallthru
      _
    // Predicated region
    $region6: #{tpu_custom_call.1} parent=1 // pred_check
      _
    $region7: #{tpu_custom_call.1} parent=1 // pred_check_branch
      %16 = sbr.rel (0) target = $region9
    $region8: #{tpu_custom_call.1} parent=1 // pred_region
      _
    $region9: #{tpu_custom_call.1} parent=1 // pred_fallthru
      _
    // Predicated region
    $region10: #{tpu_custom_call.1} parent=1 // pred_check
      _
    $region11: #{tpu_custom_call.1} parent=1 // pred_check_branch
      %18 = sbr.rel (0) target = $region13
    $region12: #{tpu_custom_call.1} parent=1 // pred_region
      _
    $region13: #{tpu_custom_call.1} parent=1 // pred_fallthru
      _
    // Predicated region
    $region14: #{tpu_custom_call.1} parent=1 // pred_check
      _
    $region15: #{tpu_custom_call.1} parent=1 // pred_check_branch
      %20 = sbr.rel (0) target = $region17
    $region16: #{tpu_custom_call.1} parent=1 // pred_region
      _
    $region17: #{tpu_custom_call.1} parent=1 // pred_fallthru
      _
    // Predicated region
    $region18: #{tpu_custom_call.1} parent=1 // pred_check
      _
    $region19: #{tpu_custom_call.1} parent=1 // pred_check_branch
      %22 = sbr.rel (0) target = $region21
    $region20: #{tpu_custom_call.1} parent=1 // pred_region
      _
    $region21: #{tpu_custom_call.1} parent=1 // pred_fallthru
      _
    // Predicated region
    $region22: #{tpu_custom_call.1} parent=1 // pred_check
      _
    $region23: #{tpu_custom_call.1} parent=1 // pred_check_branch
      %24 = sbr.rel (0) target = $region25
    $region24: #{tpu_custom_call.1} parent=1 // pred_region
      _
    $region25: #{tpu_custom_call.1} parent=1 // pred_fallthru
      _
    // Predicated region
    $region26: #{tpu_custom_call.1} parent=1 // pred_check
      _
    $region27: #{tpu_custom_call.1} parent=1 // pred_check_branch
      %26 = sbr.rel (0) target = $region29
    $region28: #{tpu_custom_call.1} parent=1 // pred_region
      _
    $region29: #{tpu_custom_call.1} parent=1 // pred_fallthru
      _
    %v27 = vld [vmem:[%s1] sm:$0x3f]
    %v28 = vld [vmem:[%s0] sm:$0xff]
    %v29 = vld [vmem:[%s0 + $0x8] sm:$0xff]
    %v30 = vld [vmem:[%s0 + $0x10] sm:$0xff]
    %v31 = vld [vmem:[%s0 + $0x18] sm:$0xff]
    %v32 = vld [vmem:[%s0 + $0x20] sm:$0xff]
    %v33 = vld [vmem:[%s0 + $0x28] sm:$0xff]
    %v34 = vld [vmem:[%s0 + $0x30] sm:$0xff]
    %v35 = vld [vmem:[%s0 + $0x38] sm:$0xff]
    %v36 = vld [vmem:[%s0 + $0x40] sm:$0xff]
    %v37 = vld [vmem:[%s0 + $0x48] sm:$0xff]
    %v38 = vld [vmem:[%s0 + $0x50] sm:$0xff]
    %v39 = vld [vmem:[%s0 + $0x58] sm:$0xff]
    %v40 = vld [vmem:[%s2] sm:$0x1]
    %v42 = vperm.slane %v40, 0
    %vm44 = vcmask 48128
    %v46 = vsel %vm44, %v28, 0
    %v49 = vsel %vm44, %v29, 0
    %v52 = vsel %vm44, %v30, 0
    %v55 = vsel %vm44, %v31, 0
    %v58 = vsel %vm44, %v32, 0
    %v61 = vsel %vm44, %v33, 0
    %v64 = vsel %vm44, %v34, 0
    %v67 = vsel %vm44, %v35, 0
    %v70 = vsel %vm44, %v36, 0
    %v73 = vsel %vm44, %v37, 0
    %v76 = vsel %vm44, %v38, 0
    %v79 = vsel %vm44, %v39, 0
    %vm81 = vcmask 1045504
    %v83 = vsel %vm81, %v27, 0
    %85 = vmatpush.msra.mxu0 0.0
    %86 = vmatpush.msra.mxu0 0.0
    %87 = vmatpush.msra.mxu0 0.0
    %88 = vmatpush.msra.mxu0 0.0
    %89 = vmatpush.msra.mxu0 0.0
    %90 = vmatpush.msra.mxu0 0.0
    %91 = vmatpush.msra.mxu0 0.0
    %92 = vmatpush.msra.mxu0 0.0
    %93 = vmatpush.msra.mxu0 0.0
    %94 = vmatpush.msra.mxu0 0.0
    %95 = vmatpush.msra.mxu0 0.0
    %96 = vmatpush.msra.mxu0 0.0
    %97 = vmatpush.msra.mxu0 0.0
    %98 = vmatpush.msra.mxu0 0.0
    %99 = vmatpush.msra.mxu0 0.0
    %100 = vmatpush.msra.mxu0 %v83
    %101 = vmatmul.f32.gmra.mxu0 %v46
    %v102 = vpop.f32.mrf.mxu0
    %v103 = vadd.f32 %v42, %v102
    %104 = vmatmul.f32.gmra.mxu0 %v49
    %v105 = vpop.f32.mrf.mxu0
    %v106 = vadd.f32 %v42, %v105
    %107 = vmatmul.f32.gmra.mxu0 %v52
    %v108 = vpop.f32.mrf.mxu0
    %v109 = vadd.f32 %v42, %v108
    %110 = vmatmul.f32.gmra.mxu0 %v55
    %v111 = vpop.f32.mrf.mxu0
    %v112 = vadd.f32 %v42, %v111
    %113 = vmatmul.f32.gmra.mxu0 %v58
    %v114 = vpop.f32.mrf.mxu0
    %v115 = vadd.f32 %v42, %v114
    %116 = vmatmul.f32.gmra.mxu0 %v61
    %v117 = vpop.f32.mrf.mxu0
    %v118 = vadd.f32 %v42, %v117
    %119 = vmatmul.f32.gmra.mxu0 %v64
    %v120 = vpop.f32.mrf.mxu0
    %v121 = vadd.f32 %v42, %v120
    %122 = vmatmul.f32.gmra.mxu0 %v67
    %v123 = vpop.f32.mrf.mxu0
    %v124 = vadd.f32 %v42, %v123
    %125 = vmatmul.f32.gmra.mxu0 %v70
    %v126 = vpop.f32.mrf.mxu0
    %v127 = vadd.f32 %v42, %v126
    %128 = vmatmul.f32.gmra.mxu0 %v73
    %v129 = vpop.f32.mrf.mxu0
    %v130 = vadd.f32 %v42, %v129
    %131 = vmatmul.f32.gmra.mxu0 %v76
    %v132 = vpop.f32.mrf.mxu0
    %v133 = vadd.f32 %v42, %v132
    %134 = vmatmul.f32.gmra.mxu0 %v79
    %v135 = vpop.f32.mrf.mxu0
    %v136 = vadd.f32 %v42, %v135
    %137 = vdwg.mxu0
    %v138 = vmax.f32 %v103, 0.0
    %v139 = vmax.f32 %v106, 0.0
    %v140 = vmax.f32 %v109, 0.0
    %v141 = vmax.f32 %v112, 0.0
    %v142 = vmax.f32 %v115, 0.0
    %v143 = vmax.f32 %v118, 0.0
    %v144 = vmax.f32 %v121, 0.0
    %v145 = vmax.f32 %v124, 0.0
    %v146 = vmax.f32 %v127, 0.0
    %v147 = vmax.f32 %v130, 0.0
    %v148 = vmax.f32 %v133, 0.0
    %v149 = vmax.f32 %v136, 0.0
    %v150 = vld [vmem:[%s3] sm:$0xff]
    %v151 = vld [vmem:[%s3 + $0x8] sm:$0xff]
    %v152 = vld [vmem:[%s3 + $0x10] sm:$0xff]
    %v153 = vld [vmem:[%s3 + $0x18] sm:$0xff]
    %v154 = vld [vmem:[%s4] sm:$0x1]
    %v156 = vperm.slane %v154, 0
    %vm158 = vcmask 261120
    %v160 = vsel %vm158, %v138, 0
    %v163 = vsel %vm158, %v139, 0
    %v166 = vsel %vm158, %v140, 0
    %v169 = vsel %vm158, %v141, 0
    %v172 = vsel %vm158, %v142, 0
    %v175 = vsel %vm158, %v143, 0
    %v178 = vsel %vm158, %v144, 0
    %v181 = vsel %vm158, %v145, 0
    %v184 = vsel %vm158, %v146, 0
    %v187 = vsel %vm158, %v147, 0
    %v190 = vsel %vm158, %v148, 0
    %v193 = vsel %vm158, %v149, 0
    %195 = vmatpush.msra.mxu0 0.0
    %196 = vmatpush.msra.mxu0 0.0
    %197 = vmatpush.msra.mxu0 0.0
    %198 = vmatpush.msra.mxu0 0.0
    %199 = vmatpush.msra.mxu0 0.0
    %200 = vmatpush.msra.mxu0 0.0
    %201 = vmatpush.msra.mxu0 0.0
    %202 = vmatpush.msra.mxu0 0.0
    %203 = vmatpush.msra.mxu0 0.0
    %204 = vmatpush.msra.mxu0 0.0
    %205 = vmatpush.msra.mxu0 0.0
    %206 = vmatpush.msra.mxu0 0.0
    %207 = vmatpush.msra.mxu0 %v153
    %208 = vmatpush.msra.mxu0 %v152
    %209 = vmatpush.msra.mxu0 %v151
    %210 = vmatpush.msra.mxu0 %v150
    %211 = vmatmul.f32.gmra.mxu0 %v160
    %v212 = vpop.f32.mrf.mxu0
    %v213 = vadd.f32 %v156, %v212
    %214 = vmatmul.f32.gmra.mxu0 %v163
    %v215 = vpop.f32.mrf.mxu0
    %v216 = vadd.f32 %v156, %v215
    %217 = vmatmul.f32.gmra.mxu0 %v166
    %v218 = vpop.f32.mrf.mxu0
    %v219 = vadd.f32 %v156, %v218
    %220 = vmatmul.f32.gmra.mxu0 %v169
    %v221 = vpop.f32.mrf.mxu0
    %v222 = vadd.f32 %v156, %v221
    %223 = vmatmul.f32.gmra.mxu0 %v172
    %v224 = vpop.f32.mrf.mxu0
    %v225 = vadd.f32 %v156, %v224
    %226 = vmatmul.f32.gmra.mxu0 %v175
    %v227 = vpop.f32.mrf.mxu0
    %v228 = vadd.f32 %v156, %v227
    %229 = vmatmul.f32.gmra.mxu0 %v178
    %v230 = vpop.f32.mrf.mxu0
    %v231 = vadd.f32 %v156, %v230
    %232 = vmatmul.f32.gmra.mxu0 %v181
    %v233 = vpop.f32.mrf.mxu0
    %v234 = vadd.f32 %v156, %v233
    %235 = vmatmul.f32.gmra.mxu0 %v184
    %v236 = vpop.f32.mrf.mxu0
    %v237 = vadd.f32 %v156, %v236
    %238 = vmatmul.f32.gmra.mxu0 %v187
    %v239 = vpop.f32.mrf.mxu0
    %v240 = vadd.f32 %v156, %v239
    %241 = vmatmul.f32.gmra.mxu0 %v190
    %v242 = vpop.f32.mrf.mxu0
    %v243 = vadd.f32 %v156, %v242
    %244 = vmatmul.f32.gmra.mxu0 %v193
    %v245 = vpop.f32.mrf.mxu0
    %v246 = vadd.f32 %v156, %v245
    %247 = vdwg.mxu0
    %v248 = vmax.f32 %v213, 0.0
    %v249 = vmax.f32 %v216, 0.0
    %v250 = vmax.f32 %v219, 0.0
    %v251 = vmax.f32 %v222, 0.0
    %v252 = vmax.f32 %v225, 0.0
    %v253 = vmax.f32 %v228, 0.0
    %v254 = vmax.f32 %v231, 0.0
    %v255 = vmax.f32 %v234, 0.0
    %v256 = vmax.f32 %v237, 0.0
    %v257 = vmax.f32 %v240, 0.0
    %v258 = vmax.f32 %v243, 0.0
    %v259 = vmax.f32 %v246, 0.0
    %v260 = vld [vmem:[%s5] sm:$0xff]
    %v261 = vld [vmem:[%s5 + $0x8] sm:$0xff]
    %v262 = vld [vmem:[%s5 + $0x10] sm:$0xff]
    %v263 = vld [vmem:[%s5 + $0x18] sm:$0xff]
    %v264 = vld [vmem:[%s6] sm:$0x1]
    %v266 = vperm.slane %v264, 0
    %v269 = vsel %vm158, %v248, 0
    %v272 = vsel %vm158, %v249, 0
    %v275 = vsel %vm158, %v250, 0
    %v278 = vsel %vm158, %v251, 0
    %v281 = vsel %vm158, %v252, 0
    %v284 = vsel %vm158, %v253, 0
    %v287 = vsel %vm158, %v254, 0
    %v290 = vsel %vm158, %v255, 0
    %v293 = vsel %vm158, %v256, 0
    %v296 = vsel %vm158, %v257, 0
    %v299 = vsel %vm158, %v258, 0
    %v302 = vsel %vm158, %v259, 0
    %304 = vmatpush.msra.mxu0 0.0
    %305 = vmatpush.msra.mxu0 0.0
    %306 = vmatpush.msra.mxu0 0.0
    %307 = vmatpush.msra.mxu0 0.0
    %308 = vmatpush.msra.mxu0 0.0
    %309 = vmatpush.msra.mxu0 0.0
    %310 = vmatpush.msra.mxu0 0.0
    %311 = vmatpush.msra.mxu0 0.0
    %312 = vmatpush.msra.mxu0 0.0
    %313 = vmatpush.msra.mxu0 0.0
    %314 = vmatpush.msra.mxu0 0.0
    %315 = vmatpush.msra.mxu0 0.0
    %316 = vmatpush.msra.mxu0 %v263
    %317 = vmatpush.msra.mxu0 %v262
    %318 = vmatpush.msra.mxu0 %v261
    %319 = vmatpush.msra.mxu0 %v260
    %320 = vmatmul.f32.gmra.mxu0 %v269
    %v321 = vpop.f32.mrf.mxu0
    %v322 = vadd.f32 %v266, %v321
    %323 = vmatmul.f32.gmra.mxu0 %v272
    %v324 = vpop.f32.mrf.mxu0
    %v325 = vadd.f32 %v266, %v324
    %326 = vmatmul.f32.gmra.mxu0 %v275
    %v327 = vpop.f32.mrf.mxu0
    %v328 = vadd.f32 %v266, %v327
    %329 = vmatmul.f32.gmra.mxu0 %v278
    %v330 = vpop.f32.mrf.mxu0
    %v331 = vadd.f32 %v266, %v330
    %332 = vmatmul.f32.gmra.mxu0 %v281
    %v333 = vpop.f32.mrf.mxu0
    %v334 = vadd.f32 %v266, %v333
    %335 = vmatmul.f32.gmra.mxu0 %v284
    %v336 = vpop.f32.mrf.mxu0
    %v337 = vadd.f32 %v266, %v336
    %338 = vmatmul.f32.gmra.mxu0 %v287
    %v339 = vpop.f32.mrf.mxu0
    %v340 = vadd.f32 %v266, %v339
    %341 = vmatmul.f32.gmra.mxu0 %v290
    %v342 = vpop.f32.mrf.mxu0
    %v343 = vadd.f32 %v266, %v342
    %344 = vmatmul.f32.gmra.mxu0 %v293
    %v345 = vpop.f32.mrf.mxu0
    %v346 = vadd.f32 %v266, %v345
    %347 = vmatmul.f32.gmra.mxu0 %v296
    %v348 = vpop.f32.mrf.mxu0
    %v349 = vadd.f32 %v266, %v348
    %350 = vmatmul.f32.gmra.mxu0 %v299
    %v351 = vpop.f32.mrf.mxu0
    %v352 = vadd.f32 %v266, %v351
    %353 = vmatmul.f32.gmra.mxu0 %v302
    %v354 = vpop.f32.mrf.mxu0
    %v355 = vadd.f32 %v266, %v354
    %356 = vdwg.mxu0
    %v357 = vmax.f32 %v322, 0.0
    %v358 = vmax.f32 %v325, 0.0
    %v359 = vmax.f32 %v328, 0.0
    %v360 = vmax.f32 %v331, 0.0
    %v361 = vmax.f32 %v334, 0.0
    %v362 = vmax.f32 %v337, 0.0
    %v363 = vmax.f32 %v340, 0.0
    %v364 = vmax.f32 %v343, 0.0
    %v365 = vmax.f32 %v346, 0.0
    %v366 = vmax.f32 %v349, 0.0
    %v367 = vmax.f32 %v352, 0.0
    %v368 = vmax.f32 %v355, 0.0
    %369 = vst [vmem:[#allocation2] sm:$0xff] %v357
    %370 = vst [vmem:[#allocation2 + $0x8] sm:$0xff] %v358
    %371 = vst [vmem:[#allocation2 + $0x10] sm:$0xff] %v359
    %372 = vst [vmem:[#allocation2 + $0x18] sm:$0xff] %v360
    %373 = vst [vmem:[#allocation2 + $0x20] sm:$0xff] %v361
    %374 = vst [vmem:[#allocation2 + $0x28] sm:$0xff] %v362
    %375 = vst [vmem:[#allocation2 + $0x30] sm:$0xff] %v363
    %376 = vst [vmem:[#allocation2 + $0x38] sm:$0xff] %v364
    %377 = vst [vmem:[#allocation2 + $0x40] sm:$0xff] %v365
    %378 = vst [vmem:[#allocation2 + $0x48] sm:$0xff] %v366
    %379 = vst [vmem:[#allocation2 + $0x50] sm:$0xff] %v367
    %380 = vst [vmem:[#allocation2 + $0x58] sm:$0xff] %v368
    // Predicated region
    $region30: #{tpu_custom_call.1} parent=1 // pred_check
      _
    $region31: #{tpu_custom_call.1} parent=1 // pred_check_branch
      %382 = sbr.rel (0) target = $region33
    $region32: #{tpu_custom_call.1} parent=1 // pred_region
      %384 = vsyncadd [#allocation3], 0
      %s385 = sshll.u32 [#allocation2], 4
      %s386 = int_to_ptr.vmem [resolvable:$true] %s385
      %s387 = sshll.u32 %s7, 4
      %s388 = int_to_ptr.hbm [resolvable:$true] %s387
      %393 = dma.vmem_to_hbm [thread:$0]  %s386, 1536, %s388, [#allocation3], 128, 128, 8
    $region33: #{tpu_custom_call.1} parent=1 // pred_fallthru
      _
    // Predicated region
    $region34: #{tpu_custom_call.1} parent=1 // pred_check
      _
    $region35: #{tpu_custom_call.1} parent=1 // pred_check_branch
      %395 = sbr.rel (0) target = $region37
    $region36: #{tpu_custom_call.1} parent=1 // pred_region
      %397 = dma.done [#allocation3], 1536
    $region37: #{tpu_custom_call.1} parent=1 // pred_fallthru
      _
    %398 = vsyncpa [#allocation3], 1

</llo_original>
